<compile_context>
chip_gen: v6e
topology: v6e:2x2x1
jax: 0.10.0
libtpu: 0.0.40
codegen_flags: <defaults>
</compile_context>

<pallas_src>
import functools

import jax
import jax.numpy as jnp
from jax.experimental import pallas as pl
from jax.experimental.pallas import tpu as pltpu


def _round_up(a, b):
    return ((a + b - 1) // b) * b


def _pick_tile(hw_pad, max_tile):
    """Largest multiple of 128 that is <= max_tile and divides hw_pad."""
    t = max(128, (min(max_tile, hw_pad) // 128) * 128)
    while hw_pad % t != 0:
        t -= 128
    return t


def _ohem_pixel_ce_kernel(w_ref, x_ref, y_ref, loss_ref, *, lb_ignore):
    """Per-pixel weighted CE over one (C, T) pixel tile.

    loss_p = weight[y_p] * (logsumexp_c x[c, p] - x[y_p, p]); 0 for ignored
    pixels. Matches nn.CrossEntropyLoss(weight, ignore_index, reduction='none').
    """
    x = x_ref[0].astype(jnp.float32)          # (C, T)  classes on sublanes
    y = y_ref[0]                              # (1, T)  int32 labels
    w = w_ref[...]                            # (C, 1)  f32 class weights

    c, t = x.shape

    # numerically-stable log-sum-exp over the class (sublane) axis
    m = jnp.max(x, axis=0, keepdims=True)                               # (1, T)
    lse = m + jnp.log(jnp.sum(jnp.exp(x - m), axis=0, keepdims=True))   # (1, T)

    # gather logit / weight at the label via a cheap VPU select (no MXU)
    cls = jax.lax.broadcasted_iota(jnp.int32, (c, t), 0)                # (C, T)
    sel = cls == y                                                      # (C, T)
    x_y = jnp.sum(jnp.where(sel, x, 0.0), axis=0, keepdims=True)        # (1, T)
    w_y = jnp.sum(jnp.where(sel, w, 0.0), axis=0, keepdims=True)        # (1, T)

    valid = y != lb_ignore
    loss_ref[0] = jnp.where(valid, w_y * (lse - x_y), jnp.float32(0.0))


def _pixel_ce_pallas(logits_3d, labels_3d, weights_2d, lb_ignore, tile_hw):
    n, c, hw_pad = logits_3d.shape
    grid = (n, hw_pad // tile_hw)
    kernel = functools.partial(_ohem_pixel_ce_kernel, lb_ignore=lb_ignore)
    return pl.pallas_call(
        kernel,
        out_shape=jax.ShapeDtypeStruct((n, 1, hw_pad), jnp.float32),
        grid_spec=pltpu.PrefetchScalarGridSpec(
            num_scalar_prefetch=0,
            grid=grid,
            in_specs=[
                pl.BlockSpec((c, 1), lambda b, i: (0, 0)),               # weights
                pl.BlockSpec((1, c, tile_hw), lambda b, i: (b, 0, i)),   # logits
                pl.BlockSpec((1, 1, tile_hw), lambda b, i: (b, 0, i)),   # labels
            ],
            out_specs=pl.BlockSpec((1, 1, tile_hw), lambda b, i: (b, 0, i)),
        ),
        compiler_params=pltpu.CompilerParams(
            dimension_semantics=("parallel", "parallel")),
    )(weights_2d, logits_3d, labels_3d)


def ohem_ce_weighted_loss(logits, labels, thresh, weights, lb_ignore=255,
                          max_tile_hw=2048):
    """Forward pass of OhemCEWeightedLoss.

    logits: (N, C, H, W) float (any float dtype; upcast happens in-kernel)
    labels: (N, H, W)    int   (lb_ignore marks ignored pixels)
    """
    n, c, h, w = logits.shape
    hw = h * w
    p = n * hw

    # Free reshapes only -- no transpose, no wrapper dtype cast.
    x = logits.reshape(n, c, hw)
    y = labels.reshape(n, 1, hw).astype(jnp.int32)
    w_cls = jnp.asarray(weights, jnp.float32).reshape(c, 1)

    hw_pad = _round_up(hw, 128)
    tile_hw = _pick_tile(hw_pad, max_tile_hw)
    if hw_pad != hw:
        x = jnp.pad(x, ((0, 0), (0, 0), (0, hw_pad - hw)))
        y = jnp.pad(y, ((0, 0), (0, 0), (0, hw_pad - hw)),
                    constant_values=lb_ignore)

    loss3 = _pixel_ce_pallas(x, y, w_cls, lb_ignore, tile_hw)   # (N, 1, HW_pad)
    loss = loss3[:, 0, :hw].reshape(-1)                         # (P,)

    # --- OHEM selection (data-dependent counts -> stays in JAX) ---
    labels_flat = labels.reshape(-1)
    th = -jnp.log(jnp.float32(thresh))

    n_valid = jnp.sum(labels_flat != lb_ignore)
    n_min = n_valid // 16

    hard_mask = loss > th
    n_hard = jnp.sum(hard_mask)
    sum_hard = jnp.sum(jnp.where(hard_mask, loss, 0.0))

    k_max = max(p // 16, 1)   # static upper bound on n_min

    def _topk_mean(_):
        # fallback path: mean of the top n_min losses (only executed when
        # n_hard < n_min thanks to lax.cond -- no always-on full sort).
        vals, _ = jax.lax.top_k(loss, k_max)
        rank = jnp.arange(k_max)
        s = jnp.sum(jnp.where(rank < n_min, vals, 0.0))
        return s / jnp.maximum(n_min, 1).astype(jnp.float32)

    def _hard_mean(_):
        # guard 0/0 when every pixel is ignored (PyTorch returns NaN there;
        # we return 0.0 instead).
        return sum_hard / jnp.maximum(n_hard, 1).astype(jnp.float32)

    return jax.lax.cond(n_hard < n_min, _topk_mean, _hard_mean, None)


if __name__ == "__main__":
    key = jax.random.PRNGKey(0)
    k1, k2, k3 = jax.random.split(key, 3)

    N, C, H, W = 2, 4, 16, 16
    logits = jax.random.normal(k1, (N, C, H, W), jnp.float32)
    labels = jax.random.randint(k2, (N, H, W), 0, C, jnp.int32)
    ignore_mask = jax.random.uniform(k3, (N, H, W)) < 0.1
    labels = jnp.where(ignore_mask, 255, labels).astype(jnp.int32)

    # deterministic "module init": thresh and per-class weights
    thresh = 0.7
    weights = [1.0, 2.0, 0.5, 1.5]

    out = ohem_ce_weighted_loss(logits, labels, thresh, weights, lb_ignore=255)
    jax.block_until_ready(out)
    print("KERNEL_OK")
</pallas_src>

<mosaic_0001>
module attributes {stable_mosaic.version = 11 : i64} {
  func.func @_ohem_pixel_ce_kernel(%arg0: i32, %arg1: i32, %arg2: memref<4x1xf32, #tpu.memory_space<vmem>>, %arg3: memref<1x4x256xf32, #tpu.memory_space<vmem>>, %arg4: memref<1x1x256xi32, #tpu.memory_space<vmem>>, %arg5: memref<1x1x256xf32, #tpu.memory_space<vmem>>) attributes {dimension_semantics = [#tpu.dimension_semantics<parallel>, #tpu.dimension_semantics<parallel>], iteration_bounds = array<i64: 2, 1>, scalar_prefetch = 0 : i64, scratch_operands = 0 : i64, tpu.core_type = #tpu.core_type<tc>, window_params = [{pipeline_mode = #tpu.pipeline_mode<synchronous>, transform_indices = @transform_0, window_bounds = array<i64: 4, 1>}, {transform_indices = @transform_1, window_bounds = array<i64: 1, 4, 256>}, {transform_indices = @transform_2, window_bounds = array<i64: 1, 1, 256>}, {transform_indices = @transform_3, window_bounds = array<i64: 1, 1, 256>}]} {
    %c0 = arith.constant 0 : index
    %c0_0 = arith.constant 0 : index
    %c0_1 = arith.constant 0 : index
    %0 = vector.load %arg3[%c0, %c0_0, %c0_1] : memref<1x4x256xf32, #tpu.memory_space<vmem>>, vector<1x4x256xf32>
    %1 = vector.shape_cast %0 : vector<1x4x256xf32> to vector<4x256xf32>
    %c0_2 = arith.constant 0 : index
    %c0_3 = arith.constant 0 : index
    %c0_4 = arith.constant 0 : index
    %2 = vector.load %arg4[%c0_2, %c0_3, %c0_4] : memref<1x1x256xi32, #tpu.memory_space<vmem>>, vector<1x1x256xi32>
    %3 = vector.shape_cast %2 : vector<1x1x256xi32> to vector<1x256xi32>
    %c0_5 = arith.constant 0 : index
    %c0_6 = arith.constant 0 : index
    %4 = vector.load %arg2[%c0_5, %c0_6] : memref<4x1xf32, #tpu.memory_space<vmem>>, vector<4x1xf32>
    %cst = arith.constant dense<0xFF800000> : vector<256xf32>
    %5 = vector.multi_reduction <maximumf>, %1, %cst [0] : vector<4x256xf32> to vector<256xf32>
    %6 = vector.shape_cast %5 : vector<256xf32> to vector<1x256xf32>
    %7 = vector.broadcast %6 : vector<1x256xf32> to vector<4x256xf32>
    %8 = arith.subf %1, %7 : vector<4x256xf32>
    %9 = math.exp %8 : vector<4x256xf32>
    %cst_7 = arith.constant dense<0.000000e+00> : vector<256xf32>
    %10 = vector.multi_reduction <add>, %9, %cst_7 [0] : vector<4x256xf32> to vector<256xf32>
    %11 = vector.shape_cast %10 : vector<256xf32> to vector<1x256xf32>
    %12 = math.log %11 : vector<1x256xf32>
    %13 = arith.addf %6, %12 : vector<1x256xf32>
    %14 = tpu.iota {dimensions = array<i32: 0>} : vector<4x256xi32>
    %15 = vector.broadcast %3 : vector<1x256xi32> to vector<4x256xi32>
    %16 = arith.cmpi eq, %14, %15 : vector<4x256xi32>
    %cst_8 = arith.constant 0.000000e+00 : f32
    %17 = vector.broadcast %cst_8 : f32 to vector<4x256xf32>
    %18 = arith.select %16, %1, %17 : vector<4x256xi1>, vector<4x256xf32>
    %cst_9 = arith.constant dense<0.000000e+00> : vector<256xf32>
    %19 = vector.multi_reduction <add>, %18, %cst_9 [0] : vector<4x256xf32> to vector<256xf32>
    %20 = vector.shape_cast %19 : vector<256xf32> to vector<1x256xf32>
    %cst_10 = arith.constant 0.000000e+00 : f32
    %21 = vector.shape_cast %4 : vector<4x1xf32> to vector<4x1xf32>
    %22 = vector.broadcast %21 : vector<4x1xf32> to vector<4x256xf32>
    %23 = vector.broadcast %cst_10 : f32 to vector<4x256xf32>
    %24 = arith.select %16, %22, %23 : vector<4x256xi1>, vector<4x256xf32>
    %cst_11 = arith.constant dense<0.000000e+00> : vector<256xf32>
    %25 = vector.multi_reduction <add>, %24, %cst_11 [0] : vector<4x256xf32> to vector<256xf32>
    %26 = vector.shape_cast %25 : vector<256xf32> to vector<1x256xf32>
    %c255_i32 = arith.constant 255 : i32
    %27 = vector.broadcast %c255_i32 : i32 to vector<1x256xi32>
    %28 = arith.cmpi ne, %3, %27 : vector<1x256xi32>
    %29 = arith.subf %13, %20 : vector<1x256xf32>
    %30 = arith.mulf %26, %29 : vector<1x256xf32>
    %cst_12 = arith.constant 0.000000e+00 : f32
    %31 = vector.broadcast %cst_12 : f32 to vector<1x256xf32>
    %32 = arith.select %28, %30, %31 : vector<1x256xi1>, vector<1x256xf32>
    %c0_13 = arith.constant 0 : index
    %c0_14 = arith.constant 0 : index
    %c0_15 = arith.constant 0 : index
    %33 = vector.load %arg5[%c0_13, %c0_14, %c0_15] : memref<1x1x256xf32, #tpu.memory_space<vmem>>, vector<1x1x256xf32>
    %34 = vector.shape_cast %33 : vector<1x1x256xf32> to vector<1x256xf32>
    %35 = vector.shape_cast %32 : vector<1x256xf32> to vector<1x1x256xf32>
    tpu.vector_store %arg5[%c0_13, %c0_14, %c0_15], %35 {strides = array<i32>} : memref<1x1x256xf32, #tpu.memory_space<vmem>>, vector<1x1x256xf32>,
    return
  }
  func.func @transform_0(%arg0: i32, %arg1: i32) -> (i32, i32) {
    %c0_i32 = arith.constant 0 : i32
    %c0_i32_0 = arith.constant 0 : i32
    %c0_i32_1 = arith.constant 0 : i32
    return %c0_i32, %c0_i32_0 : i32, i32
  }
  func.func @transform_1(%arg0: i32, %arg1: i32) -> (i32, i32, i32) {
    %c0_i32 = arith.constant 0 : i32
    %c0_i32_0 = arith.constant 0 : i32
    return %arg0, %c0_i32, %arg1 : i32, i32, i32
  }
  func.func @transform_2(%arg0: i32, %arg1: i32) -> (i32, i32, i32) {
    %c0_i32 = arith.constant 0 : i32
    %c0_i32_0 = arith.constant 0 : i32
    return %arg0, %c0_i32, %arg1 : i32, i32, i32
  }
  func.func @transform_3(%arg0: i32, %arg1: i32) -> (i32, i32, i32) {
    %c0_i32 = arith.constant 0 : i32
    %c0_i32_0 = arith.constant 0 : i32
    return %arg0, %c0_i32, %arg1 : i32, i32, i32
  }
}

</mosaic_0001>

<llo_original>
// kernel: tpu_custom_call.1
$region0: #{tpu_custom_call.1}
  #allocation0 [shape = 'u32[]', space=smem, size = 0x4, offset = 0x4, fixed_abs, tag = 'smem constant byte address 0x4 - core index']
  #allocation1 [shape = 'u32[144,128]{1,0:T(1,128)}', space=vmem, size = 0x12000, scoped, tag = 'internal scratch']
  %s0 = inlined_call_operand.vmem [shape: f32[4,1], index: 0, kind: input, shape index: {}]
  %s1 = inlined_call_operand.hbm [shape: f32[2,4,256], index: 1, kind: input, shape index: {}]
  %s2 = inlined_call_operand.vmem [shape: s32[2,1,256], index: 2, kind: input, shape index: {}]
  %s3 = inlined_call_operand.hbm [shape: f32[2,1,256], index: 3, kind: output, shape index: {}]
  %s4 = sld [smem:[#allocation0]]
  $region49: #{tpu_custom_call.1} parent=0
    _
  %s6 = ssub.s32 1, %s4
  %s7 = scalar_select 0, %s6, %s4
  $region1: #{tpu_custom_call.1} parent=0
    #allocation2 [shape = 'u8[8192]{0}', space=vmem, size = 0x2000, scoped, tag = 'input window, operand 1']
    #allocation3 [shape = 's32[2]{0}', space=sflag, size = 0x8, scoped, tag = 'scoped memory for tpu_custom_call.1']
    #allocation4 [shape = 's32[2]{0}', space=sflag, size = 0x8, scoped, tag = 'scoped memory for tpu_custom_call.1']
    #allocation5 [shape = 'u8[2048]{0}', space=vmem, size = 0x800, scoped, tag = 'output window, operand 0']
    %8 = vsyncpa [#allocation3], 0
    %s9 = scalar_lea.sflag [#allocation3], 1
    %10 = vsyncpa %s9, 0
    %11 = vsyncpa [#allocation4], 0
    %s12 = scalar_lea.sflag [#allocation4], 1
    %13 = vsyncpa %s12, 0
    loop: start=0, step=1, limit=4
    $region2: #{tpu_custom_call.1} parent=1 // loop_pre_header
      _
    $region3: #{tpu_custom_call.1} parent=1 // loop_header
      %s15 = sphi 0, %s19
      %p16 = scmp.ge.s32.totalorder %s15, 4
      %s22 = sphi 0, %s34
      %s23 = sphi 0, %s30
      %s24 = sphi 0, %s22
      %s25 = sphi 0, %s23
      %s26 = sphi 0, %s24
      %s27 = sphi 0, %s25
      %s35 = sphi 0, %s35
      %s37 = sphi 0, %s35
      %s38 = sphi 0, %s37
      %s52 = sphi 0, %s38
      %s60 = sphi 0, %s62
      %s63 = sphi 0, %s60
      %s64 = sphi 0, %s63
      %s80 = sphi 0, %s64
      %s88 = sphi 0, %s90
      %s91 = sphi 0, %s88
      %s92 = sphi 0, %s91
      %s108 = sphi 0, %s92
      %s116 = sphi 0, %s118
      %s119 = sphi 0, %s116
      %s120 = sphi 0, %s119
      %s136 = sphi 0, %s120
    $region4: #{tpu_custom_call.1} parent=1 // loop_header_branch
      %18 = sbr.rel (%p16) target = $region8
    $region5: #{tpu_custom_call.1} parent=1 // loop_body
      %s20 = ssub.s32 %s15, 1
      %s21 = ssub.s32 %s15, 2
      %s28 = sadd.s32 1, %s23
      %p29 = scmp.ge.s32.totalorder %s28, 1
      %s30 = scalar_select %p29, 0, %s28
      %s31 = sadd.s32 1, %s22
      %s32 = scalar_select %p29, %s31, %s22
      %p33 = scmp.ge.s32.totalorder %s32, 2
      %s34 = scalar_select %p33, 0, %s32
      %s36 = sadd.s32 %s35, 1
      %p39 = scmp.eq.s32.totalorder %s15, 1
      %p40 = scmp.ne.s32.totalorder %s35, %s37
      %p41 = scmp.eq.s32.totalorder %s15, 0
      %p42 = por %p40, %p41
      %p43 = scmp.ne.s32.totalorder %s35, %s37
      %p44 = scmp.eq.s32.totalorder %s20, 1
      %p45 = por %p43, %p44
      %p46 = scmp.ne.s32.totalorder %s37, %s38
      %p47 = scmp.eq.s32.totalorder %s20, 0
      %p48 = por %p46, %p47
      %p49 = scmp.ne.s32.totalorder %s37, %s38
      %p50 = scmp.eq.s32.totalorder %s21, 1
      %p51 = por %p49, %p50
      %p53 = scmp.ne.s32.totalorder %s38, %s52
      %p54 = scmp.eq.s32.totalorder %s21, 0
      %p55 = por %p53, %p54
      %s56 = ssub.s32 %s22, %s34
      %s57 = ssub.s32 %s23, %s30
      %s58 = sor.u32 %s56, %s57
      %p59 = scmp.eq.s32.totalorder %s58, 0
      %s61 = sadd.s32 %s60, 1
      %s62 = scalar_select %p59, %s60, %s61
      %p65 = pneg %p59
      %p66 = scmp.eq.s32.totalorder %s15, 1
      %p67 = por %p65, %p66
      %p68 = scmp.ne.s32.totalorder %s60, %s63
      %p69 = scmp.eq.s32.totalorder %s15, 0
      %p70 = por %p68, %p69
      %p71 = scmp.ne.s32.totalorder %s60, %s63
      %p72 = scmp.eq.s32.totalorder %s20, 1
      %p73 = por %p71, %p72
      %p74 = scmp.ne.s32.totalorder %s63, %s64
      %p75 = scmp.eq.s32.totalorder %s20, 0
      %p76 = por %p74, %p75
      %p77 = scmp.ne.s32.totalorder %s63, %s64
      %p78 = scmp.eq.s32.totalorder %s21, 1
      %p79 = por %p77, %p78
      %p81 = scmp.ne.s32.totalorder %s64, %s80
      %p82 = scmp.eq.s32.totalorder %s21, 0
      %p83 = por %p81, %p82
      %s84 = ssub.s32 %s22, %s34
      %s85 = ssub.s32 %s23, %s30
      %s86 = sor.u32 %s84, %s85
      %p87 = scmp.eq.s32.totalorder %s86, 0
      %s89 = sadd.s32 %s88, 1
      %s90 = scalar_select %p87, %s88, %s89
      %p93 = pneg %p87
      %p94 = scmp.eq.s32.totalorder %s15, 1
      %p95 = por %p93, %p94
      %p96 = scmp.ne.s32.totalorder %s88, %s91
      %p97 = scmp.eq.s32.totalorder %s15, 0
      %p98 = por %p96, %p97
      %p99 = scmp.ne.s32.totalorder %s88, %s91
      %p100 = scmp.eq.s32.totalorder %s20, 1
      %p101 = por %p99, %p100
      %p102 = scmp.ne.s32.totalorder %s91, %s92
      %p103 = scmp.eq.s32.totalorder %s20, 0
      %p104 = por %p102, %p103
      %p105 = scmp.ne.s32.totalorder %s91, %s92
      %p106 = scmp.eq.s32.totalorder %s21, 1
      %p107 = por %p105, %p106
      %p109 = scmp.ne.s32.totalorder %s92, %s108
      %p110 = scmp.eq.s32.totalorder %s21, 0
      %p111 = por %p109, %p110
      %s112 = ssub.s32 %s22, %s34
      %s113 = ssub.s32 %s23, %s30
      %s114 = sor.u32 %s112, %s113
      %p115 = scmp.eq.s32.totalorder %s114, 0
      %s117 = sadd.s32 %s116, 1
      %s118 = scalar_select %p115, %s116, %s117
      %p121 = pneg %p115
      %p122 = scmp.eq.s32.totalorder %s15, 1
      %p123 = por %p121, %p122
      %p124 = scmp.ne.s32.totalorder %s116, %s119
      %p125 = scmp.eq.s32.totalorder %s15, 0
      %p126 = por %p124, %p125
      %p127 = scmp.ne.s32.totalorder %s116, %s119
      %p128 = scmp.eq.s32.totalorder %s20, 1
      %p129 = por %p127, %p128
      %p130 = scmp.ne.s32.totalorder %s119, %s120
      %p131 = scmp.eq.s32.totalorder %s20, 0
      %p132 = por %p130, %p131
      %p133 = scmp.ne.s32.totalorder %s119, %s120
      %p134 = scmp.eq.s32.totalorder %s21, 1
      %p135 = por %p133, %p134
      %p137 = scmp.ne.s32.totalorder %s120, %s136
      %p138 = scmp.eq.s32.totalorder %s21, 0
      %p139 = por %p137, %p138
      %p140 = scmp.le.s32.totalorder 1, %s15
      %p141 = scmp.lt.s32.totalorder %s15, 3
      %p142 = pnand %p140, %p141
      %p143 = pneg %p142
      // Predicated region
      $region9: #{tpu_custom_call.1} parent=5 // pred_check
        _
      $region10: #{tpu_custom_call.1} parent=5 // pred_check_branch
        %145 = sbr.rel (%p142) target = $region12
      $region11: #{tpu_custom_call.1} parent=5 // pred_region
        %s146 = ssub.s32 %s15, 1
        // Predicated region
        $region13: #{tpu_custom_call.1} parent=11 // pred_check
          %p147 = pneg %p48
        $region14: #{tpu_custom_call.1} parent=11 // pred_check_branch
          %149 = sbr.rel (%p147) target = $region16
        $region15: #{tpu_custom_call.1} parent=11 // pred_region
          _
        $region16: #{tpu_custom_call.1} parent=11 // pred_fallthru
          _
      $region12: #{tpu_custom_call.1} parent=5 // pred_fallthru
        _
      %p150 = scmp.lt.s32.totalorder %s15, 2
      // Predicated region
      $region17: #{tpu_custom_call.1} parent=5 // pred_check
        %p151 = pneg %p150
      $region18: #{tpu_custom_call.1} parent=5 // pred_check_branch
        %153 = sbr.rel (%p151) target = $region20
      $region19: #{tpu_custom_call.1} parent=5 // pred_region
        // Predicated region
        $region21: #{tpu_custom_call.1} parent=19 // pred_check
          %p154 = pneg %p70
        $region22: #{tpu_custom_call.1} parent=19 // pred_check_branch
          %156 = sbr.rel (%p154) target = $region24
        $region23: #{tpu_custom_call.1} parent=19 // pred_region
          %s157 = sand.u32 %s60, 1
          %s158 = scalar_lea.sflag [#allocation3], %s157
          %s159 = sand.u32 %s60, 1
          %s160 = smul.addr %s159, 8
          %s161 = scalar_lea.vmem [#allocation2], %s160
          %s162 = smul.u32 2, %s23
          %s164 = ssub.s32 128, 128
          %165 = vsyncadd %s158, %s164
          %s166 = smul.addr %s22, 2
          %s167 = sadd.s32 %s162, %s166
          %s168 = smul.addr %s167, 64
          %s169 = scalar_lea.hbm %s1, %s168
          %s171 = sshll.u32 %s161, 4
          %s172 = int_to_ptr.vmem [resolvable:$true] %s171
          %174 = dma.hbm_to_vmem [thread:$0]  %s169, 128, %s172, %s158
        $region24: #{tpu_custom_call.1} parent=19 // pred_fallthru
          _
        // Predicated region
        $region25: #{tpu_custom_call.1} parent=19 // pred_check
          %p175 = pneg %p98
        $region26: #{tpu_custom_call.1} parent=19 // pred_check_branch
          %177 = sbr.rel (%p175) target = $region28
        $region27: #{tpu_custom_call.1} parent=19 // pred_region
          %s178 = smul.u32 2, %s23
          %p179 = scmp.lt.s32.totalorder %s22, 1
          %s180 = scalar_select %p179, %s22, 1
          %p181 = scmp.lt.s32.totalorder %s178, 1
          %s182 = scalar_select %p181, %s178, 1
          %s183 = smul.addr %s180, 2
          %s184 = sadd.s32 %s182, %s183
          %s185 = scalar_lea.vmem %s2, %s184
          %s186 = smul.u32 2, %s23
        $region28: #{tpu_custom_call.1} parent=19 // pred_fallthru
          _
      $region20: #{tpu_custom_call.1} parent=5 // pred_fallthru
        _
      %p187 = scmp.le.s32.totalorder 1, %s15
      %p188 = scmp.lt.s32.totalorder %s15, 3
      %p189 = pnand %p187, %p188
      %p190 = pneg %p189
      // Predicated region
      $region29: #{tpu_custom_call.1} parent=5 // pred_check
        _
      $region30: #{tpu_custom_call.1} parent=5 // pred_check_branch
        %192 = sbr.rel (%p189) target = $region32
      $region31: #{tpu_custom_call.1} parent=5 // pred_region
        %s193 = ssub.s32 %s15, 1
        %s194 = sand.u32 %s63, 1
        %s195 = scalar_lea.sflag [#allocation3], %s194
        %s196 = sand.u32 %s63, 1
        %s197 = smul.addr %s196, 8
        %s198 = scalar_lea.vmem [#allocation2], %s197
        // Predicated region
        $region33: #{tpu_custom_call.1} parent=31 // pred_check
          %p199 = pneg %p76
        $region34: #{tpu_custom_call.1} parent=31 // pred_check_branch
          %201 = sbr.rel (%p199) target = $region36
        $region35: #{tpu_custom_call.1} parent=31 // pred_region
          %202 = dma.done %s195, 128
        $region36: #{tpu_custom_call.1} parent=31 // pred_fallthru
          _
        %p203 = pneg %p48
        %p204 = pneg %p45
        %s205 = sand.u32 %s63, 1
        %s206 = scalar_lea.sflag [#allocation3], %s205
        %s207 = sand.u32 %s63, 1
        %s208 = smul.addr %s207, 8
        %s209 = scalar_lea.vmem [#allocation2], %s208
        %p210 = pneg %p76
        %p211 = pneg %p73
        %s212 = smul.u32 2, %s25
        %p213 = scmp.lt.s32.totalorder %s24, 1
        %s214 = scalar_select %p213, %s24, 1
        %p215 = scmp.lt.s32.totalorder %s212, 1
        %s216 = scalar_select %p215, %s212, 1
        %s217 = smul.addr %s214, 2
        %s218 = sadd.s32 %s216, %s217
        %s219 = scalar_lea.vmem %s2, %s218
        %p220 = pneg %p104
        %p221 = pneg %p101
        %p222 = pneg %p132
        %p223 = pneg %p129
        %s224 = sand.u32 %s119, 1
        %s225 = scalar_lea.sflag [#allocation4], %s224
        %s226 = sand.u32 %s119, 1
        %s227 = smul.addr %s226, 2
        %s228 = scalar_lea.vmem [#allocation5], %s227
        %s229 = smul.u32 2, %s25
        %s230 = smul.u32 2, %s25
        %p231 = scmp.lt.s32.totalorder %s24, 1
        %s232 = scalar_select %p231, %s24, 1
        %p233 = scmp.lt.s32.totalorder %s230, 1
        %s234 = scalar_select %p233, %s230, 1
        %s235 = smul.addr %s232, 2
        %s236 = sadd.s32 %s234, %s235
        %s237 = scalar_lea.vmem %s2, %s236
        %s238 = smul.u32 2, %s25
        %s239 = smul.u32 2, %s25
        %v240 = vld [vmem:[%s198] sm:$0xff]
        %v241 = vld [vmem:[%s237] sm:$0x3]
        %v242 = vld [vmem:[%s0] sm:$0xf]
        %v244 = vcombine.high %v240, %v240
        %vm246 = vcmask 1043456
        %v247 = vsel %vm246, %v240, -inf
        %v248 = vrot.slane %v247, 4
        %v249 = vmax.f32 %v247, %v248
        %v250 = vrot.slane %v249, 2
        %v251 = vmax.f32 %v249, %v250
        %v252 = vrot.slane %v251, 1
        %v253 = vmax.f32 %v251, %v252
        %v254 = vsel %vm246, %v244, -inf
        %v255 = vrot.slane %v254, 4
        %v256 = vmax.f32 %v254, %v255
        %v257 = vrot.slane %v256, 2
        %v258 = vmax.f32 %v256, %v257
        %v259 = vrot.slane %v258, 1
        %v260 = vmax.f32 %v258, %v259
        %v263 = vcombine.low %v253, %v260
        %v265 = vsub.f32 %v240, %v263
        %v266 = vmul.f32 %v265, 1.442695
        %v267 = vpow.pop %v266
        %v269 = vcombine.high %v267, %v267
        %v271 = vsel %vm246, %v267, 0.0
        %v272 = vrot.slane %v271, 4
        %v273 = vadd.f32 %v271, %v272
        %v274 = vrot.slane %v273, 2
        %v275 = vadd.f32 %v273, %v274
        %v276 = vrot.slane %v275, 1
        %v277 = vadd.f32 %v275, %v276
        %v278 = vsel %vm246, %v269, 0.0
        %v279 = vrot.slane %v278, 4
        %v280 = vadd.f32 %v278, %v279
        %v281 = vrot.slane %v280, 2
        %v282 = vadd.f32 %v280, %v281
        %v283 = vrot.slane %v282, 1
        %v284 = vadd.f32 %v282, %v283
        %v285 = vlog2.pop %v277
        %v286 = vmul.f32 %v285, 0.6931472
        %v287 = vlog2.pop %v284
        %v288 = vmul.f32 %v287, 0.6931472
        %v289 = vadd.f32 %v253, %v286
        %v290 = vadd.f32 %v260, %v288
        %v291 = vlaneseq
        %v292 = vshrl.u32 %v291, 7
        %v293 = vlaneseq
        %v294 = vshrl.u32 %v293, 7
        %v295 = vsub.s32 0, %v294
        %v296 = vrot.slane %v241, %v295
        %v297 = vlaneseq
        %v298 = vshrl.u32 %v297, 7
        %v299 = vsub.s32 1, %v298
        %v300 = vrot.slane %v241, %v299
        %vm301 = vcmp.eq.s32.totalorder %v292, %v296
        %vm302 = vcmp.eq.s32.totalorder %v292, %v300
        %v303 = vsel %vm301, %v240, 0.0
        %v304 = vsel %vm302, %v244, 0.0
        %v305 = vsel %vm246, %v303, 0.0
        %v306 = vrot.slane %v305, 4
        %v307 = vadd.f32 %v305, %v306
        %v308 = vrot.slane %v307, 2
        %v309 = vadd.f32 %v307, %v308
        %v310 = vrot.slane %v309, 1
        %v311 = vadd.f32 %v309, %v310
        %v312 = vsel %vm246, %v304, 0.0
        %v313 = vrot.slane %v312, 4
        %v314 = vadd.f32 %v312, %v313
        %v315 = vrot.slane %v314, 2
        %v316 = vadd.f32 %v314, %v315
        %v317 = vrot.slane %v316, 1
        %v318 = vadd.f32 %v316, %v317
        %320 = vset.pattern.permute.xlu0 0
        %321 = vperm.xlu0 %320, %v242
        %v322 = vpop.permute.xlu0 %321
        %v324 = vsel %vm301, %v322, 0.0
        %v325 = vsel %vm302, %v322, 0.0
        %v326 = vsel %vm246, %v324, 0.0
        %v327 = vrot.slane %v326, 4
        %v328 = vadd.f32 %v326, %v327
        %v329 = vrot.slane %v328, 2
        %v330 = vadd.f32 %v328, %v329
        %v331 = vrot.slane %v330, 1
        %v332 = vadd.f32 %v330, %v331
        %v333 = vsel %vm246, %v325, 0.0
        %v334 = vrot.slane %v333, 4
        %v335 = vadd.f32 %v333, %v334
        %v336 = vrot.slane %v335, 2
        %v337 = vadd.f32 %v335, %v336
        %v338 = vrot.slane %v337, 1
        %v339 = vadd.f32 %v337, %v338
        %vm340 = vcmp.ne.s32.totalorder %v241, 255
        %v341 = vsub.f32 %v289, %v311
        %v342 = vsub.f32 %v290, %v318
        %v343 = vmul.f32 %v332, %v341
        %v344 = vmul.f32 %v339, %v342
        %v347 = vcombine.low %v343, %v344
        %v349 = vunpack.c.l.s4 1966171168
        %v350 = vunpack.c.0.s8 %v349
        %v351 = vlaneseq
        %v352 = vshrl.u32 %v351, 7
        %v353 = vsub.s32 %v350, %v352
        %v354 = vrot.slane %v347, %v353
        %v356 = vunpack.c.l.s4 1966171168
        %v357 = vunpack.c.0.s8 %v356
        %v358 = vlaneseq
        %v359 = vshrl.u32 %v358, 7
        %v360 = vsub.s32 %v357, %v359
        %v361 = vrot.slane %v354, %v360
        %v363 = vsel %vm340, %v361, 0.0
        %v364 = vlaneseq
        %vm365 = vcmp.ge.s32.totalorder %v364, 0
        %vm366 = vcmp.lt.s32.totalorder %v364, 256
        %vm367 = vmand %vm365, %vm366
        %368 = vst.msk [vmem:[%s228] sm:$0x3] %vm367, %v363
        %s369 = sand.u32 %s119, 1
        %s370 = scalar_lea.sflag [#allocation4], %s369
        %s371 = sand.u32 %s119, 1
        %s372 = smul.addr %s371, 2
        %s373 = scalar_lea.vmem [#allocation5], %s372
        // Predicated region
        $region37: #{tpu_custom_call.1} parent=31 // pred_check
          %p374 = pneg %p129
        $region38: #{tpu_custom_call.1} parent=31 // pred_check_branch
          %376 = sbr.rel (%p374) target = $region40
        $region39: #{tpu_custom_call.1} parent=31 // pred_region
          %s377 = smul.u32 2, %s25
          %s379 = ssub.s32 32, 32
          %380 = vsyncadd %s370, %s379
          %s381 = smul.addr %s24, 2
          %s382 = sadd.s32 %s377, %s381
          %s383 = smul.addr %s382, 16
          %s384 = scalar_lea.hbm %s3, %s383
          %s386 = sshll.u32 %s373, 4
          %s387 = int_to_ptr.vmem [resolvable:$true] %s386
          %389 = dma.vmem_to_hbm [thread:$0]  %s387, 32, %s384, %s370
        $region40: #{tpu_custom_call.1} parent=31 // pred_fallthru
          _
      $region32: #{tpu_custom_call.1} parent=5 // pred_fallthru
        _
      %p390 = scmp.le.s32.totalorder 2, %s15
      // Predicated region
      $region41: #{tpu_custom_call.1} parent=5 // pred_check
        %p391 = pneg %p390
      $region42: #{tpu_custom_call.1} parent=5 // pred_check_branch
        %393 = sbr.rel (%p391) target = $region44
      $region43: #{tpu_custom_call.1} parent=5 // pred_region
        %s394 = ssub.s32 %s15, 2
        // Predicated region
        $region45: #{tpu_custom_call.1} parent=43 // pred_check
          %p395 = pneg %p135
        $region46: #{tpu_custom_call.1} parent=43 // pred_check_branch
          %397 = sbr.rel (%p395) target = $region48
        $region47: #{tpu_custom_call.1} parent=43 // pred_region
          %s398 = sand.u32 %s120, 1
          %s399 = scalar_lea.sflag [#allocation4], %s398
          %s400 = sand.u32 %s120, 1
          %s401 = smul.addr %s400, 2
          %s402 = scalar_lea.vmem [#allocation5], %s401
          %403 = dma.done %s399, 32
        $region48: #{tpu_custom_call.1} parent=43 // pred_fallthru
          _
      $region44: #{tpu_custom_call.1} parent=5 // pred_fallthru
        _
    $region6: #{tpu_custom_call.1} parent=1 // loop_footer
      %s19 = sadd.s32 1, %s15
    $region7: #{tpu_custom_call.1} parent=1 // loop_footer_branch
      %14 = sbr.rel target = $region3
    $region8: #{tpu_custom_call.1} parent=1 // loop_exit
      _
    %404 = vsyncpa [#allocation3], 1
    %s405 = scalar_lea.sflag [#allocation3], 1
    %406 = vsyncpa %s405, 1
    %407 = vsyncpa [#allocation4], 1
    %s408 = scalar_lea.sflag [#allocation4], 1
    %409 = vsyncpa %s408, 1

</llo_original>
